<compile_context>
chip_gen: v7x
topology: tpu7x:2x2x1
jax: 0.10.0
libtpu: 0.0.40
codegen_flags: <defaults>
</compile_context>

<pallas_src>
import functools
import math

import jax
import jax.numpy as jnp
from jax.experimental import pallas as pl
from jax.experimental.pallas import tpu as pltpu

EPS = 1e-5
VMEM_LIMIT_BYTES = 48 * 1024 * 1024  # > default scoped limits, < v7x 64 MiB physical


def _gelu_tanh(v):
    # TODO(synk): torch.nn.GELU() defaults to the exact erf form; the tanh
    # approximation (max abs deviation ~1e-3) is used since erf has no
    # guaranteed Mosaic lowering. Other `activation` strings are not handled.
    c = math.sqrt(2.0 / math.pi)
    return 0.5 * v * (1.0 + jnp.tanh(c * (v + 0.044715 * v * v * v)))


def _pick_t_block(t):
    """Largest lane-dense (multiple-of-128) divisor of T, capped at 512; else full T."""
    for cand in (512, 256, 128):
        if t % cand == 0:
            return cand
    return t


# ----------------------------- Pass 1: BN1 stats ------------------------------
def _bn_stats_kernel(x_ref, sum_ref, sumsq_ref):
    """Accumulate per-channel sum(x) and sum(x*x) over (batch, time) tiles."""
    @pl.when(pl.program_id(0) == 0)
    def _init():
        sum_ref[...] = jnp.zeros_like(sum_ref)
        sumsq_ref[...] = jnp.zeros_like(sumsq_ref)

    x = x_ref[...].astype(jnp.float32)                    # (B, Cin, Tt)
    xs = jnp.sum(x, axis=0)                               # (Cin, Tt)
    xss = jnp.sum(x * x, axis=0)                          # (Cin, Tt)
    sum_ref[...] += jnp.sum(xs, axis=1, keepdims=True)    # (Cin, 1)
    sumsq_ref[...] += jnp.sum(xss, axis=1, keepdims=True)


# ----------------- Pass 2: normalize + dilated conv + y stats -----------------
def _norm_conv_kernel(x_ref, s1_ref, sh1_ref, w_ref, bc_ref,
                      y_ref, ysum_ref, ysumsq_ref, xpad_ref,
                      *, k, dilation, pad_left):
    """One sample: BN1 affine-normalize, 'same' dilated Conv1d, y statistics."""
    t = y_ref.shape[-1]
    cout = y_ref.shape[1]

    x = x_ref[0].astype(jnp.float32)                      # (Cin, T)
    xn = x * s1_ref[...] + sh1_ref[...]                   # BatchNorm1d (affine=True)

    # Zero-padded normalized input for padding='same' (pad AFTER normalization,
    # matching torch which pads the conv input with zeros).
    xpad_ref[...] = jnp.zeros_like(xpad_ref)
    xpad_ref[:, pad_left:pad_left + t] = xn

    acc = jnp.zeros((cout, t), jnp.float32)
    for kk in range(k):                                   # K is small & static
        off = kk * dilation
        acc = acc + jnp.dot(w_ref[kk], xpad_ref[:, off:off + t],
                            preferred_element_type=jnp.float32)
    y = acc + bc_ref[...]                                 # (Cout, T)

    y_ref[0] = y.astype(y_ref.dtype)
    ysum_ref[0] = jnp.sum(y, axis=1, keepdims=True)       # (Cout, 1)
    ysumsq_ref[0] = jnp.sum(y * y, axis=1, keepdims=True)


# -------------- Pass 3: BN2 + FiLM + GELU + residual 1x1 conv -----------------
def _finalize_kernel(y_ref, x_ref, s2_ref, sh2_ref, g_ref, bta_ref,
                     wr_ref, br_ref, out_ref):
    y = y_ref[0].astype(jnp.float32)                      # (Cout, Tt)
    x = x_ref[0].astype(jnp.float32)                      # (Cin, Tt)
    yn = y * s2_ref[...] + sh2_ref[...]                   # FiLM BatchNorm (affine=False)
    mod = yn * g_ref[0] + bta_ref[0]                      # gamma/beta modulation
    act = _gelu_tanh(mod)
    res = jnp.dot(wr_ref[...], x, preferred_element_type=jnp.float32) + br_ref[...]
    out_ref[0] = (act + res).astype(out_ref.dtype)


# --------------------------------- Wrapper ------------------------------------
def dilated_residual_conv_forward(x, bn1_w, bn1_b, conv_w, conv_b, res_w, res_b,
                                  *, dilation, film_w=None, film_b=None,
                                  embedding=None):
    """x: (B, Cin, T); conv_w: (Cout, Cin, K); res_w: (Cout, Cin, 1);
    film_w: (E, 2*Cout) (= torch Linear weight transposed); embedding: (B, 1, E)."""
    assert x.ndim == 3
    B, Cin, T = x.shape
    Cout, _, K = conv_w.shape
    use_film = film_w is not None
    if use_film:
        assert embedding is not None and embedding.ndim == 3 and embedding.shape[1] == 1

    t_blk = _pick_t_block(T)
    nT = T // t_blk
    n = B * T

    # ---- Pass 1: BatchNorm1d(x) training-mode batch statistics (single pass) ----
    xsum, xsumsq = pl.pallas_call(
        _bn_stats_kernel,
        grid=(nT,),
        in_specs=[pl.BlockSpec((B, Cin, t_blk), lambda t: (0, 0, t))],
        out_specs=(pl.BlockSpec((Cin, 1), lambda t: (0, 0)),
                   pl.BlockSpec((Cin, 1), lambda t: (0, 0))),
        out_shape=(jax.ShapeDtypeStruct((Cin, 1), jnp.float32),
                   jax.ShapeDtypeStruct((Cin, 1), jnp.float32)),
        compiler_params=pltpu.CompilerParams(
            dimension_semantics=("arbitrary",),
            vmem_limit_bytes=VMEM_LIMIT_BYTES),
        cost_estimate=pl.CostEstimate(flops=3 * B * Cin * T, transcendentals=0,
                                      bytes_accessed=4 * B * Cin * T),
    )(x)
    mean1 = xsum[:, 0] / n
    var1 = jnp.maximum(xsumsq[:, 0] / n - mean1 * mean1, 0.0)   # biased var
    rstd1 = jax.lax.rsqrt(var1 + EPS)
    scale1 = (bn1_w * rstd1)[:, None].astype(jnp.float32)        # (Cin, 1)
    shift1 = (bn1_b - bn1_w * mean1 * rstd1)[:, None].astype(jnp.float32)
    # TODO(synk): BatchNorm running_mean/running_var/num_batches_tracked updates
    # (training side effects) are not emitted; forward output is unaffected.

    # ---- FiLM gamma/beta: tiny Linear(E -> 2*Cout), hoisted out of the kernels ----
    if use_film:
        emb = embedding[:, 0, :].astype(jnp.float32)             # squeeze(1)
        film = emb @ film_w + film_b                             # (B, 2*Cout)
        gamma = film[:, :Cout][:, :, None]                       # (B, Cout, 1)
        beta = film[:, Cout:][:, :, None]
    else:
        gamma = jnp.ones((B, Cout, 1), jnp.float32)
        beta = jnp.zeros((B, Cout, 1), jnp.float32)

    # ---- Pass 2: normalize + dilated 'same' conv + per-sample y stats ----
    total_pad = dilation * (K - 1)
    pad_left = total_pad // 2                                    # torch 'same' split
    w_k = jnp.transpose(conv_w, (2, 0, 1)).astype(jnp.float32)   # (K, Cout, Cin)
    y, ysum, ysumsq = pl.pallas_call(
        functools.partial(_norm_conv_kernel, k=K, dilation=dilation,
                          pad_left=pad_left),
        grid=(B,),
        in_specs=[pl.BlockSpec((1, Cin, T), lambda b: (b, 0, 0)),
                  pl.BlockSpec((Cin, 1), lambda b: (0, 0)),
                  pl.BlockSpec((Cin, 1), lambda b: (0, 0)),
                  pl.BlockSpec((K, Cout, Cin), lambda b: (0, 0, 0)),
                  pl.BlockSpec((Cout, 1), lambda b: (0, 0))],
        out_specs=(pl.BlockSpec((1, Cout, T), lambda b: (b, 0, 0)),
                   pl.BlockSpec((1, Cout, 1), lambda b: (b, 0, 0)),
                   pl.BlockSpec((1, Cout, 1), lambda b: (b, 0, 0))),
        out_shape=(jax.ShapeDtypeStruct((B, Cout, T), jnp.float32),
                   jax.ShapeDtypeStruct((B, Cout, 1), jnp.float32),
                   jax.ShapeDtypeStruct((B, Cout, 1), jnp.float32)),
        scratch_shapes=[pltpu.VMEM((Cin, T + total_pad), jnp.float32)],
        compiler_params=pltpu.CompilerParams(
            dimension_semantics=("parallel",),
            vmem_limit_bytes=VMEM_LIMIT_BYTES),
        cost_estimate=pl.CostEstimate(
            flops=2 * B * Cout * Cin * K * T + 4 * B * Cout * T,
            transcendentals=0,
            bytes_accessed=4 * (B * Cin * T + B * Cout * T)),
    )(x, scale1, shift1, w_k, conv_b[:, None].astype(jnp.float32))
    # TODO(synk): for very long T the conv pass should also tile T with a halo
    # (manual DMA / pl.Element); it currently keeps the full T per sample in VMEM.

    # ---- FiLM BatchNorm1d(y, affine=False) batch statistics (tiny finalize) ----
    if use_film:
        mean2 = jnp.sum(ysum[:, :, 0], axis=0) / n               # (Cout,)
        var2 = jnp.maximum(jnp.sum(ysumsq[:, :, 0], axis=0) / n - mean2 * mean2, 0.0)
        rstd2 = jax.lax.rsqrt(var2 + EPS)
        s2 = rstd2[:, None].astype(jnp.float32)                  # (Cout, 1)
        sh2 = (-mean2 * rstd2)[:, None].astype(jnp.float32)
    else:
        s2 = jnp.ones((Cout, 1), jnp.float32)
        sh2 = jnp.zeros((Cout, 1), jnp.float32)

    # ---- Pass 3: BN2 + FiLM + GELU + residual 1x1 conv, lane-dense T tiles ----
    res_w2 = res_w[:, :, 0].astype(jnp.float32)                  # (Cout, Cin)
    out = pl.pallas_call(
        _finalize_kernel,
        grid=(B, nT),
        in_specs=[pl.BlockSpec((1, Cout, t_blk), lambda b, t: (b, 0, t)),
                  pl.BlockSpec((1, Cin, t_blk), lambda b, t: (b, 0, t)),
                  pl.BlockSpec((Cout, 1), lambda b, t: (0, 0)),
                  pl.BlockSpec((Cout, 1), lambda b, t: (0, 0)),
                  pl.BlockSpec((1, Cout, 1), lambda b, t: (b, 0, 0)),
                  pl.BlockSpec((1, Cout, 1), lambda b, t: (b, 0, 0)),
                  pl.BlockSpec((Cout, Cin), lambda b, t: (0, 0)),
                  pl.BlockSpec((Cout, 1), lambda b, t: (0, 0))],
        out_specs=pl.BlockSpec((1, Cout, t_blk), lambda b, t: (b, 0, t)),
        out_shape=jax.ShapeDtypeStruct((B, Cout, T), x.dtype),
        compiler_params=pltpu.CompilerParams(
            dimension_semantics=("parallel", "parallel"),
            vmem_limit_bytes=VMEM_LIMIT_BYTES),
        cost_estimate=pl.CostEstimate(
            flops=2 * B * Cout * Cin * T + 14 * B * Cout * T,
            transcendentals=B * Cout * T,
            bytes_accessed=4 * (2 * B * Cout * T + B * Cin * T)),
    )(y, x, s2, sh2, gamma, beta, res_w2, res_b[:, None].astype(jnp.float32))
    return out


# ------------------------------- Pure-JAX reference ---------------------------
def dilated_residual_conv_ref(x, bn1_w, bn1_b, conv_w, conv_b, res_w, res_b,
                              *, dilation, film_w=None, film_b=None,
                              embedding=None):
    hp = jax.lax.Precision.HIGHEST
    mean = x.mean(axis=(0, 2), keepdims=True)
    var = ((x - mean) ** 2).mean(axis=(0, 2), keepdims=True)
    xn = (x - mean) / jnp.sqrt(var + EPS) * bn1_w[None, :, None] + bn1_b[None, :, None]

    k = conv_w.shape[-1]
    total = dilation * (k - 1)
    lp = total // 2
    y = jax.lax.conv_general_dilated(
        xn, conv_w, window_strides=(1,), padding=[(lp, total - lp)],
        rhs_dilation=(dilation,), dimension_numbers=("NCH", "OIH", "NCH"),
        precision=hp) + conv_b[None, :, None]

    if film_w is not None:
        m2 = y.mean(axis=(0, 2), keepdims=True)
        v2 = ((y - m2) ** 2).mean(axis=(0, 2), keepdims=True)
        yn = (y - m2) / jnp.sqrt(v2 + EPS)
        emb = embedding[:, 0, :]
        film = emb @ film_w + film_b
        cout = y.shape[1]
        gamma, beta = film[:, :cout], film[:, cout:]
        y = yn * gamma[:, :, None] + beta[:, :, None]

    act = _gelu_tanh(y)
    res = jax.lax.conv_general_dilated(
        x, res_w, window_strides=(1,), padding=[(0, 0)],
        dimension_numbers=("NCH", "OIH", "NCH"), precision=hp) + res_b[None, :, None]
    return act + res


if __name__ == "__main__":
    B, Cin, Cout, K, DIL, T, E = 2, 4, 8, 3, 2, 1024, 32

    key = jax.random.PRNGKey(0)
    keys = jax.random.split(key, 10)
    x = jax.random.normal(keys[0], (B, Cin, T), jnp.float32)
    embedding = jax.random.normal(keys[1], (B, 1, E), jnp.float32)

    bn1_w = 1.0 + 0.1 * jax.random.normal(keys[2], (Cin,), jnp.float32)
    bn1_b = 0.1 * jax.random.normal(keys[3], (Cin,), jnp.float32)
    conv_w = jax.random.normal(keys[4], (Cout, Cin, K), jnp.float32) / math.sqrt(Cin * K)
    conv_b = 0.1 * jax.random.normal(keys[5], (Cout,), jnp.float32)
    res_w = jax.random.normal(keys[6], (Cout, Cin, 1), jnp.float32) / math.sqrt(Cin)
    res_b = 0.1 * jax.random.normal(keys[7], (Cout,), jnp.float32)
    # torch Linear(E, 2*Cout) weight is (2*Cout, E); passed transposed as (E, 2*Cout)
    bound = 1.0 / math.sqrt(E)
    film_w = jax.random.uniform(keys[8], (E, 2 * Cout), jnp.float32, -bound, bound)
    film_b = jax.random.uniform(keys[9], (2 * Cout,), jnp.float32, -bound, bound)

    # use_film=True path
    out = dilated_residual_conv_forward(
        x, bn1_w, bn1_b, conv_w, conv_b, res_w, res_b,
        dilation=DIL, film_w=film_w, film_b=film_b, embedding=embedding)
    out = jax.block_until_ready(out)
    ref = dilated_residual_conv_ref(
        x, bn1_w, bn1_b, conv_w, conv_b, res_w, res_b,
        dilation=DIL, film_w=film_w, film_b=film_b, embedding=embedding)
    assert out.shape == (B, Cout, T)
    assert jnp.allclose(out, ref, atol=5e-4, rtol=5e-4), (
        "FiLM path mismatch vs reference, max abs err = "
        f"{float(jnp.max(jnp.abs(out - ref)))}")

    # use_film=False path (module default)
    out2 = dilated_residual_conv_forward(
        x, bn1_w, bn1_b, conv_w, conv_b, res_w, res_b, dilation=DIL)
    out2 = jax.block_until_ready(out2)
    ref2 = dilated_residual_conv_ref(
        x, bn1_w, bn1_b, conv_w, conv_b, res_w, res_b, dilation=DIL)
    assert jnp.allclose(out2, ref2, atol=5e-4, rtol=5e-4), (
        "no-FiLM path mismatch vs reference, max abs err = "
        f"{float(jnp.max(jnp.abs(out2 - ref2)))}")

    print("KERNEL_OK")
</pallas_src>

<mosaic_0001>
module attributes {stable_mosaic.version = 11 : i64} {
  func.func @_bn_stats_kernel(%arg0: i32, %arg1: memref<2x4x512xf32, #tpu.memory_space<vmem>>, %arg2: memref<4x1xf32, #tpu.memory_space<vmem>>, %arg3: memref<4x1xf32, #tpu.memory_space<vmem>>) attributes {dimension_semantics = [#tpu.dimension_semantics<arbitrary>], iteration_bounds = array<i64: 2>, scalar_prefetch = 0 : i64, scratch_operands = 0 : i64, tpu.core_type = #tpu.core_type<tc>, window_params = [{transform_indices = @transform_0, window_bounds = array<i64: 2, 4, 512>}, {pipeline_mode = #tpu.pipeline_mode<synchronous>, transform_indices = @transform_1, window_bounds = array<i64: 4, 1>}, {pipeline_mode = #tpu.pipeline_mode<synchronous>, transform_indices = @transform_2, window_bounds = array<i64: 4, 1>}]} {
    %c0_i32 = arith.constant 0 : i32
    %0 = arith.cmpi eq, %arg0, %c0_i32 : i32
    %1 = arith.extui %0 : i1 to i32
    %c0_i32_0 = arith.constant 0 : i32
    %2 = arith.cmpi ne, %1, %c0_i32_0 : i32
    scf.if %2 {
      %cst_14 = arith.constant 0.000000e+00 : f32
      %17 = vector.broadcast %cst_14 : f32 to vector<4x1xf32>
      %c0_15 = arith.constant 0 : index
      %c0_16 = arith.constant 0 : index
      %18 = vector.load %arg2[%c0_15, %c0_16] : memref<4x1xf32, #tpu.memory_space<vmem>>, vector<4x1xf32>
      tpu.vector_store %arg2[%c0_15, %c0_16], %17 {strides = array<i32>} : memref<4x1xf32, #tpu.memory_space<vmem>>, vector<4x1xf32>,
      %cst_17 = arith.constant 0.000000e+00 : f32
      %19 = vector.broadcast %cst_17 : f32 to vector<4x1xf32>
      %c0_18 = arith.constant 0 : index
      %c0_19 = arith.constant 0 : index
      %20 = vector.load %arg3[%c0_18, %c0_19] : memref<4x1xf32, #tpu.memory_space<vmem>>, vector<4x1xf32>
      tpu.vector_store %arg3[%c0_18, %c0_19], %19 {strides = array<i32>} : memref<4x1xf32, #tpu.memory_space<vmem>>, vector<4x1xf32>,
    } else {
    }
    %c0 = arith.constant 0 : index
    %c0_1 = arith.constant 0 : index
    %c0_2 = arith.constant 0 : index
    %3 = vector.load %arg1[%c0, %c0_1, %c0_2] : memref<2x4x512xf32, #tpu.memory_space<vmem>>, vector<2x4x512xf32>
    %cst = arith.constant dense<0.000000e+00> : vector<4x512xf32>
    %4 = vector.multi_reduction <add>, %3, %cst [0] : vector<2x4x512xf32> to vector<4x512xf32>
    %5 = arith.mulf %3, %3 : vector<2x4x512xf32>
    %cst_3 = arith.constant dense<0.000000e+00> : vector<4x512xf32>
    %6 = vector.multi_reduction <add>, %5, %cst_3 [0] : vector<2x4x512xf32> to vector<4x512xf32>
    %c0_4 = arith.constant 0 : index
    %c0_5 = arith.constant 0 : index
    %7 = vector.load %arg2[%c0_4, %c0_5] : memref<4x1xf32, #tpu.memory_space<vmem>>, vector<4x1xf32>
    %cst_6 = arith.constant dense<0.000000e+00> : vector<4xf32>
    %8 = vector.multi_reduction <add>, %4, %cst_6 [1] : vector<4x512xf32> to vector<4xf32>
    %9 = vector.shape_cast %8 : vector<4xf32> to vector<4x1xf32>
    %10 = arith.addf %7, %9 : vector<4x1xf32>
    %c0_7 = arith.constant 0 : index
    %c0_8 = arith.constant 0 : index
    %11 = vector.load %arg2[%c0_7, %c0_8] : memref<4x1xf32, #tpu.memory_space<vmem>>, vector<4x1xf32>
    tpu.vector_store %arg2[%c0_7, %c0_8], %10 {strides = array<i32>} : memref<4x1xf32, #tpu.memory_space<vmem>>, vector<4x1xf32>,
    %c0_9 = arith.constant 0 : index
    %c0_10 = arith.constant 0 : index
    %12 = vector.load %arg3[%c0_9, %c0_10] : memref<4x1xf32, #tpu.memory_space<vmem>>, vector<4x1xf32>
    %cst_11 = arith.constant dense<0.000000e+00> : vector<4xf32>
    %13 = vector.multi_reduction <add>, %6, %cst_11 [1] : vector<4x512xf32> to vector<4xf32>
    %14 = vector.shape_cast %13 : vector<4xf32> to vector<4x1xf32>
    %15 = arith.addf %12, %14 : vector<4x1xf32>
    %c0_12 = arith.constant 0 : index
    %c0_13 = arith.constant 0 : index
    %16 = vector.load %arg3[%c0_12, %c0_13] : memref<4x1xf32, #tpu.memory_space<vmem>>, vector<4x1xf32>
    tpu.vector_store %arg3[%c0_12, %c0_13], %15 {strides = array<i32>} : memref<4x1xf32, #tpu.memory_space<vmem>>, vector<4x1xf32>,
    return
  }
  func.func @transform_0(%arg0: i32) -> (i32, i32, i32) {
    %c0_i32 = arith.constant 0 : i32
    %c0_i32_0 = arith.constant 0 : i32
    %c0_i32_1 = arith.constant 0 : i32
    return %c0_i32, %c0_i32_0, %arg0 : i32, i32, i32
  }
  func.func @transform_1(%arg0: i32) -> (i32, i32) {
    %c0_i32 = arith.constant 0 : i32
    %c0_i32_0 = arith.constant 0 : i32
    %c0_i32_1 = arith.constant 0 : i32
    return %c0_i32, %c0_i32_0 : i32, i32
  }
  func.func @transform_2(%arg0: i32) -> (i32, i32) {
    %c0_i32 = arith.constant 0 : i32
    %c0_i32_0 = arith.constant 0 : i32
    %c0_i32_1 = arith.constant 0 : i32
    return %c0_i32, %c0_i32_0 : i32, i32
  }
}

</mosaic_0001>

<llo_original>
// kernel: tpu_custom_call.1
$region0: #{tpu_custom_call.1}
  #allocation0 [shape = 'u32[]', space=smem, size = 0x4, offset = 0x4, fixed_abs, tag = 'smem constant byte address 0x4 - core index']
  #allocation1 [shape = 'u32[144,128]{1,0:T(1,128)}', space=vmem, size = 0x12000, scoped, tag = 'internal scratch']
  %s0 = inlined_call_operand.hbm [shape: f32[2,4,1024], index: 0, kind: input, shape index: {}]
  %s1 = inlined_call_operand.vmem [shape: f32[4,1], index: 1, kind: output, shape index: {0}]
  %s2 = inlined_call_operand.vmem [shape: f32[4,1], index: 2, kind: output, shape index: {1}]
  %3 = xla_tuple %s1, %s2
  %s4 = sld [smem:[#allocation0]]
  $region53: #{tpu_custom_call.1} parent=0
    _
  %s6 = ssub.s32 1, %s4
  %s7 = scalar_select 0, %s6, %s4
  $region1: #{tpu_custom_call.1} parent=0
    #allocation2 [shape = 'u8[32768]{0}', space=vmem, size = 0x8000, scoped, tag = 'input window, operand 0']
    #allocation3 [shape = 's32[2]{0}', space=sflag, size = 0x8, scoped, tag = 'scoped memory for tpu_custom_call.1']
    %8 = vsyncpa [#allocation3], 0
    %s9 = scalar_lea.sflag [#allocation3], 1
    %10 = vsyncpa %s9, 0
    loop: start=0, step=1, limit=4
    $region2: #{tpu_custom_call.1} parent=1 // loop_pre_header
      _
    $region3: #{tpu_custom_call.1} parent=1 // loop_header
      %s12 = sphi 0, %s16
      %p13 = scmp.ge.s32.totalorder %s12, 4
      %s22 = sphi 0, %s24
      %s25 = sphi 0, %s22
      %s26 = sphi 0, %s25
      %s42 = sphi 0, %s26
      %s46 = sphi 0, %s46
      %s48 = sphi 0, %s46
      %s49 = sphi 0, %s48
      %s63 = sphi 0, %s49
      %s67 = sphi 0, %s67
      %s69 = sphi 0, %s67
      %s70 = sphi 0, %s69
      %s84 = sphi 0, %s70
    $region4: #{tpu_custom_call.1} parent=1 // loop_header_branch
      %15 = sbr.rel (%p13) target = $region8
    $region5: #{tpu_custom_call.1} parent=1 // loop_body
      %s17 = ssub.s32 %s12, 1
      %s18 = ssub.s32 %s12, 2
      %s19 = sadd.s32 %s12, 1
      %s20 = ssub.s32 %s12, %s19
      %p21 = scmp.eq.s32.totalorder %s20, 0
      %s23 = sadd.s32 %s22, 1
      %s24 = scalar_select %p21, %s22, %s23
      %p27 = pneg %p21
      %p28 = scmp.eq.s32.totalorder %s12, 1
      %p29 = por %p27, %p28
      %p30 = scmp.ne.s32.totalorder %s22, %s25
      %p31 = scmp.eq.s32.totalorder %s12, 0
      %p32 = por %p30, %p31
      %p33 = scmp.ne.s32.totalorder %s22, %s25
      %p34 = scmp.eq.s32.totalorder %s17, 1
      %p35 = por %p33, %p34
      %p36 = scmp.ne.s32.totalorder %s25, %s26
      %p37 = scmp.eq.s32.totalorder %s17, 0
      %p38 = por %p36, %p37
      %p39 = scmp.ne.s32.totalorder %s25, %s26
      %p40 = scmp.eq.s32.totalorder %s18, 1
      %p41 = por %p39, %p40
      %p43 = scmp.ne.s32.totalorder %s26, %s42
      %p44 = scmp.eq.s32.totalorder %s18, 0
      %p45 = por %p43, %p44
      %s47 = sadd.s32 %s46, 1
      %p50 = scmp.eq.s32.totalorder %s12, 1
      %p51 = scmp.ne.s32.totalorder %s46, %s48
      %p52 = scmp.eq.s32.totalorder %s12, 0
      %p53 = por %p51, %p52
      %p54 = scmp.ne.s32.totalorder %s46, %s48
      %p55 = scmp.eq.s32.totalorder %s17, 1
      %p56 = por %p54, %p55
      %p57 = scmp.ne.s32.totalorder %s48, %s49
      %p58 = scmp.eq.s32.totalorder %s17, 0
      %p59 = por %p57, %p58
      %p60 = scmp.ne.s32.totalorder %s48, %s49
      %p61 = scmp.eq.s32.totalorder %s18, 1
      %p62 = por %p60, %p61
      %p64 = scmp.ne.s32.totalorder %s49, %s63
      %p65 = scmp.eq.s32.totalorder %s18, 0
      %p66 = por %p64, %p65
      %s68 = sadd.s32 %s67, 1
      %p71 = scmp.eq.s32.totalorder %s12, 1
      %p72 = scmp.ne.s32.totalorder %s67, %s69
      %p73 = scmp.eq.s32.totalorder %s12, 0
      %p74 = por %p72, %p73
      %p75 = scmp.ne.s32.totalorder %s67, %s69
      %p76 = scmp.eq.s32.totalorder %s17, 1
      %p77 = por %p75, %p76
      %p78 = scmp.ne.s32.totalorder %s69, %s70
      %p79 = scmp.eq.s32.totalorder %s17, 0
      %p80 = por %p78, %p79
      %p81 = scmp.ne.s32.totalorder %s69, %s70
      %p82 = scmp.eq.s32.totalorder %s18, 1
      %p83 = por %p81, %p82
      %p85 = scmp.ne.s32.totalorder %s70, %s84
      %p86 = scmp.eq.s32.totalorder %s18, 0
      %p87 = por %p85, %p86
      %p88 = scmp.le.s32.totalorder 1, %s12
      %p89 = scmp.lt.s32.totalorder %s12, 3
      %p90 = pnand %p88, %p89
      %p91 = pneg %p90
      // Predicated region
      $region9: #{tpu_custom_call.1} parent=5 // pred_check
        _
      $region10: #{tpu_custom_call.1} parent=5 // pred_check_branch
        %93 = sbr.rel (%p90) target = $region12
      $region11: #{tpu_custom_call.1} parent=5 // pred_region
        %s94 = ssub.s32 %s12, 1
      $region12: #{tpu_custom_call.1} parent=5 // pred_fallthru
        _
      %p95 = scmp.lt.s32.totalorder %s12, 2
      // Predicated region
      $region13: #{tpu_custom_call.1} parent=5 // pred_check
        %p96 = pneg %p95
      $region14: #{tpu_custom_call.1} parent=5 // pred_check_branch
        %98 = sbr.rel (%p96) target = $region16
      $region15: #{tpu_custom_call.1} parent=5 // pred_region
        // Predicated region
        $region17: #{tpu_custom_call.1} parent=15 // pred_check
          %p99 = pneg %p32
        $region18: #{tpu_custom_call.1} parent=15 // pred_check_branch
          %101 = sbr.rel (%p99) target = $region20
        $region19: #{tpu_custom_call.1} parent=15 // pred_region
          %s102 = sand.u32 %s22, 1
          %s103 = scalar_lea.sflag [#allocation3], %s102
          %s104 = sand.u32 %s22, 1
          %s105 = smul.addr %s104, 32
          %s106 = scalar_lea.vmem [#allocation2], %s105
          %s107 = smul.u32 4, %s12
          %s109 = ssub.s32 512, 512
          %110 = vsyncadd %s103, %s109
          %s111 = smul.addr %s107, 64
          %s112 = scalar_lea.hbm %s0, %s111
          %s113 = sshll.u32 %s106, 4
          %s114 = int_to_ptr.vmem [resolvable:$true] %s113
          %119 = dma.hbm_to_vmem [thread:$0]  %s112, 512, %s114, %s103, 512, 256, 16
        $region20: #{tpu_custom_call.1} parent=15 // pred_fallthru
          _
      $region16: #{tpu_custom_call.1} parent=5 // pred_fallthru
        _
      %p120 = scmp.le.s32.totalorder 1, %s12
      %p121 = scmp.lt.s32.totalorder %s12, 3
      %p122 = pnand %p120, %p121
      %p123 = pneg %p122
      // Predicated region
      $region21: #{tpu_custom_call.1} parent=5 // pred_check
        _
      $region22: #{tpu_custom_call.1} parent=5 // pred_check_branch
        %125 = sbr.rel (%p122) target = $region24
      $region23: #{tpu_custom_call.1} parent=5 // pred_region
        %s126 = ssub.s32 %s12, 1
        %s127 = sand.u32 %s25, 1
        %s128 = scalar_lea.sflag [#allocation3], %s127
        %s129 = sand.u32 %s25, 1
        %s130 = smul.addr %s129, 32
        %s131 = scalar_lea.vmem [#allocation2], %s130
        // Predicated region
        $region25: #{tpu_custom_call.1} parent=23 // pred_check
          %p132 = pneg %p38
        $region26: #{tpu_custom_call.1} parent=23 // pred_check_branch
          %134 = sbr.rel (%p132) target = $region28
        $region27: #{tpu_custom_call.1} parent=23 // pred_region
          %135 = dma.done %s128, 512
        $region28: #{tpu_custom_call.1} parent=23 // pred_fallthru
          _
        %s136 = sand.u32 %s25, 1
        %s137 = scalar_lea.sflag [#allocation3], %s136
        %s138 = sand.u32 %s25, 1
        %s139 = smul.addr %s138, 32
        %s140 = scalar_lea.vmem [#allocation2], %s139
        %p141 = pneg %p38
        %p142 = pneg %p35
        %p143 = pneg %p59
        %p144 = pneg %p56
        %p145 = pneg %p80
        %p146 = pneg %p77
        %s147 = smul.u32 4, %s17
        %p148 = scmp.eq.s32.totalorder %s17, 0
        // Predicated region
        $region29: #{tpu_custom_call.1} parent=23 // pred_check
          %p149 = pneg %p148
        $region30: #{tpu_custom_call.1} parent=23 // pred_check_branch
          %151 = sbr.rel (%p149) target = $region32
        $region31: #{tpu_custom_call.1} parent=23 // pred_region
          %vm152 = vcmask 3072
          %153 = vst.msk [vmem:[%s1] sm:$0xf] %vm152, 0.0
          %154 = vst.msk [vmem:[%s2] sm:$0xf] %vm152, 0.0
        $region32: #{tpu_custom_call.1} parent=23 // pred_fallthru
          _
        %v155 = vld [vmem:[%s131] sm:$0xff]
        %v156 = vld [vmem:[%s131 + $0x8] sm:$0xff]
        %v157 = vld [vmem:[%s131 + $0x10] sm:$0xff]
        %v158 = vld [vmem:[%s131 + $0x18] sm:$0xff]
        %v163 = vcombine.high %v155, %v155
        %v164 = vcombine.high %v156, %v156
        %v165 = vcombine.high %v157, %v157
        %v166 = vcombine.high %v158, %v158
        %vm171 = vcmask 1043456
        %v172 = vsel %vm171, %v155, 0.0
        %v173 = vsel %vm171, %v157, 0.0
        %v174 = vadd.f32 %v172, %v173
        %v175 = vsel %vm171, %v163, 0.0
        %v176 = vsel %vm171, %v165, 0.0
        %v177 = vadd.f32 %v175, %v176
        %v178 = vsel %vm171, %v156, 0.0
        %v179 = vsel %vm171, %v158, 0.0
        %v180 = vadd.f32 %v178, %v179
        %v181 = vsel %vm171, %v164, 0.0
        %v182 = vsel %vm171, %v166, 0.0
        %v183 = vadd.f32 %v181, %v182
        %v184 = vmul.f32 %v155, %v155
        %v185 = vmul.f32 %v156, %v156
        %v186 = vmul.f32 %v157, %v157
        %v187 = vmul.f32 %v158, %v158
        %v192 = vcombine.high %v184, %v184
        %v193 = vcombine.high %v185, %v185
        %v194 = vcombine.high %v186, %v186
        %v195 = vcombine.high %v187, %v187
        %v200 = vsel %vm171, %v184, 0.0
        %v201 = vsel %vm171, %v186, 0.0
        %v202 = vadd.f32 %v200, %v201
        %v203 = vsel %vm171, %v192, 0.0
        %v204 = vsel %vm171, %v194, 0.0
        %v205 = vadd.f32 %v203, %v204
        %v206 = vsel %vm171, %v185, 0.0
        %v207 = vsel %vm171, %v187, 0.0
        %v208 = vadd.f32 %v206, %v207
        %v209 = vsel %vm171, %v193, 0.0
        %v210 = vsel %vm171, %v195, 0.0
        %v211 = vadd.f32 %v209, %v210
        %v212 = vld [vmem:[%s1] sm:$0xf]
        %v213 = vsel %vm171, %v174, 0.0
        %v214 = vsel %vm171, %v177, 0.0
        %v215 = vadd.f32 %v213, %v214
        %v216 = vsel %vm171, %v180, 0.0
        %v217 = vadd.f32 %v215, %v216
        %v218 = vsel %vm171, %v183, 0.0
        %v219 = vadd.f32 %v217, %v218
        %220 = vadd.xlane.f32.xlu0 %v219
        %v221 = vpop.xlane.xlu0 %220
        %v222 = vadd.f32 %v212, %v221
        %vm223 = vcmask 3072
        %224 = vst.msk [vmem:[%s1] sm:$0xf] %vm223, %v222
        %v225 = vld [vmem:[%s2] sm:$0xf]
        %v226 = vsel %vm171, %v202, 0.0
        %v227 = vsel %vm171, %v205, 0.0
        %v228 = vadd.f32 %v226, %v227
        %v229 = vsel %vm171, %v208, 0.0
        %v230 = vadd.f32 %v228, %v229
        %v231 = vsel %vm171, %v211, 0.0
        %v232 = vadd.f32 %v230, %v231
        %233 = vadd.xlane.f32.xlu0 %v232
        %v234 = vpop.xlane.xlu0 %233
        %v235 = vadd.f32 %v225, %v234
        %236 = vst.msk [vmem:[%s2] sm:$0xf] %vm223, %v235
        // Predicated region
        $region33: #{tpu_custom_call.1} parent=23 // pred_check
          %p237 = pneg %p56
        $region34: #{tpu_custom_call.1} parent=23 // pred_check_branch
          %239 = sbr.rel (%p237) target = $region36
        $region35: #{tpu_custom_call.1} parent=23 // pred_region
          _
        $region36: #{tpu_custom_call.1} parent=23 // pred_fallthru
          _
        // Predicated region
        $region37: #{tpu_custom_call.1} parent=23 // pred_check
          %p240 = pneg %p77
        $region38: #{tpu_custom_call.1} parent=23 // pred_check_branch
          %242 = sbr.rel (%p240) target = $region40
        $region39: #{tpu_custom_call.1} parent=23 // pred_region
          _
        $region40: #{tpu_custom_call.1} parent=23 // pred_fallthru
          _
        // Predicated region
        $region41: #{tpu_custom_call.1} parent=23 // pred_check
          %p243 = pneg %p56
        $region42: #{tpu_custom_call.1} parent=23 // pred_check_branch
          %245 = sbr.rel (%p243) target = $region44
        $region43: #{tpu_custom_call.1} parent=23 // pred_region
          _
        $region44: #{tpu_custom_call.1} parent=23 // pred_fallthru
          _
        // Predicated region
        $region45: #{tpu_custom_call.1} parent=23 // pred_check
          %p246 = pneg %p77
        $region46: #{tpu_custom_call.1} parent=23 // pred_check_branch
          %248 = sbr.rel (%p246) target = $region48
        $region47: #{tpu_custom_call.1} parent=23 // pred_region
          _
        $region48: #{tpu_custom_call.1} parent=23 // pred_fallthru
          _
      $region24: #{tpu_custom_call.1} parent=5 // pred_fallthru
        _
      %p249 = scmp.le.s32.totalorder 2, %s12
      // Predicated region
      $region49: #{tpu_custom_call.1} parent=5 // pred_check
        %p250 = pneg %p249
      $region50: #{tpu_custom_call.1} parent=5 // pred_check_branch
        %252 = sbr.rel (%p250) target = $region52
      $region51: #{tpu_custom_call.1} parent=5 // pred_region
        %s253 = ssub.s32 %s12, 2
      $region52: #{tpu_custom_call.1} parent=5 // pred_fallthru
        _
    $region6: #{tpu_custom_call.1} parent=1 // loop_footer
      %s16 = sadd.s32 1, %s12
    $region7: #{tpu_custom_call.1} parent=1 // loop_footer_branch
      %11 = sbr.rel target = $region3
    $region8: #{tpu_custom_call.1} parent=1 // loop_exit
      _
    %254 = vsyncpa [#allocation3], 1
    %s255 = scalar_lea.sflag [#allocation3], 1
    %256 = vsyncpa %s255, 1

</llo_original>
